<compile_context>
chip_gen: v6e
topology: v6e:2x2x1
jax: 0.10.0
libtpu: 0.0.40
codegen_flags: <defaults>
</compile_context>

<pallas_src>
import functools

import jax
import jax.numpy as jnp
from jax.experimental import pallas as pl
from jax.experimental.pallas import tpu as pltpu

EPS = 1e-5  # nn.GroupNorm default


def cnn_block_kernel(lhs_ref, rhs_ref, sel_ref, selt_ref, gamma_ref, bt_ref, o_ref,
                     *, samples, dh, inv_cnt):
    # lhs_ref:   (SB*DH, Kpad)   bf16 banded im2col rows for SB samples
    # rhs_ref:   (Kpad, WC)      bf16 banded conv weight (grid-invariant)
    # sel_ref:   (WC, G)         f32 one-hot lane -> group selector (grid-invariant)
    # selt_ref:  (G, WC)         f32 group -> lane broadcast        (grid-invariant)
    # gamma_ref: (1, WC)         f32 per-channel scale, tiled over W (grid-invariant)
    # bt_ref:    (SB, 1, WC)     f32 per-sample beta + t, tiled over W
    # o_ref:     (SB, DH, WC)    f32 lane-dense output block
    #
    # ---- conv: one bf16 MXU matmul, f32 accumulation, lane-dense output ----
    y = jnp.dot(lhs_ref[...], rhs_ref[...], preferred_element_type=jnp.float32)
    wc = y.shape[-1]
    y3 = y.reshape(samples, dh, wc)                        # split M back into (sample, d*h)

    # ---- GroupNorm: per-sample row reduce, then factored group reduce/broadcast ----
    row_sum = jnp.sum(y3, axis=1)                                          # (SB, WC)
    gsum = jnp.dot(row_sum, sel_ref[...], preferred_element_type=jnp.float32)   # (SB, G)
    mean = jnp.dot(gsum, selt_ref[...], preferred_element_type=jnp.float32) * inv_cnt

    # two-pass variance (numerically stable); y3 dead after this point (vreg reuse)
    yc = y3 - mean[:, None, :]
    sq_sum = jnp.sum(yc * yc, axis=1)                                       # (SB, WC)
    gsq = jnp.dot(sq_sum, sel_ref[...], preferred_element_type=jnp.float32)
    var = jnp.dot(gsq, selt_ref[...], preferred_element_type=jnp.float32) * inv_cnt
    yn = yc * jax.lax.rsqrt(var + EPS)[:, None, :]

    # ---- affine + (beta + t) + SiLU, all f32 and lane-dense ----
    yn = yn * gamma_ref[...] + bt_ref[...]
    o_ref[...] = (yn * jax.nn.sigmoid(yn)).astype(o_ref.dtype)


def cnn_block_forward(x_ncdhw, w_pt, gamma, beta, t=None, groups=8,
                      samples_per_block=None):
    """x_ncdhw: (N, Cin, D, H, W); w_pt: (Cout, Cin, 3, 3, 3) (PyTorch layout);
    t: optional (N, Cout, 1, 1, 1). Returns (N, Cout, D, H, W)."""
    N, Cin, D, H, W = x_ncdhw.shape
    Cout = w_pt.shape[0]
    cpg = Cout // groups
    Wp = W + 2                      # padded W
    WC = W * Cout                   # lane-dense output width (128 in the test)
    DH = D * H
    K = 9 * Wp * Cin                # (kd, kh, w_in, cin)
    Kpad = ((K + 127) // 128) * 128

    if samples_per_block is None:
        # Dual-TC v7x: keep >= 2 grid steps so both cores get work.
        # Single-TC v5e/v6e: fold the whole batch into one MXU-filling block.
        try:
            kind = jax.devices()[0].device_kind.lower()
        except Exception:
            kind = ""
        samples_per_block = max(1, N // 2) if "v7" in kind else N
    SB = samples_per_block
    assert N % SB == 0, "samples_per_block must divide N"
    NB = N // SB

    # ---- channels-last + spatial zero pad, bf16 (halves streamed im2col bytes) ----
    x = jnp.transpose(x_ncdhw, (0, 2, 3, 4, 1)).astype(jnp.bfloat16)     # NDHWC
    x_pad = jnp.pad(x, ((0, 0), (1, 1), (1, 1), (1, 1), (0, 0)))

    # ---- LHS: per output (d,h) row, the 3x3 (kd,kh) window of full padded-W rows ----
    taps = [x_pad[:, kd:kd + D, kh:kh + H, :, :]
            for kd in range(3) for kh in range(3)]                        # 9 x (N,D,H,Wp,Cin)
    lhs = jnp.stack(taps, axis=3).reshape(N, DH, K)
    lhs = jnp.pad(lhs, ((0, 0), (0, 0), (0, Kpad - K)))
    lhs = lhs.reshape(N * DH, Kpad)                                       # (N*DH, Kpad) bf16

    # ---- RHS: W-banded weight so the matmul N-axis is (w, cout) ----
    w_t = jnp.transpose(w_pt, (2, 3, 4, 1, 0)).astype(jnp.float32)        # (3,3,3,Cin,Cout)
    kw_a = jnp.arange(3)[:, None, None]
    win_a = jnp.arange(Wp)[None, :, None]
    w_a = jnp.arange(W)[None, None, :]
    band = (win_a == w_a + kw_a).astype(jnp.float32)                      # (3, Wp, W)
    rhs = jnp.einsum('kpw,dekic->depiwc', band, w_t).reshape(K, WC)
    rhs = jnp.pad(rhs, ((0, Kpad - K), (0, 0))).astype(jnp.bfloat16)      # (Kpad, WC) bf16

    # ---- factored group selector over the (w, c) lane axis: O(WC*G) not O(WC^2) ----
    lane = jnp.arange(WC)
    grp = (lane % Cout) // cpg
    sel = (grp[:, None] == jnp.arange(groups)[None, :]).astype(jnp.float32)   # (WC, G)
    selt = sel.T                                                              # (G, WC)

    # ---- lane-dense per-channel params; beta and t pre-folded into one bias ----
    gamma_wc = jnp.tile(gamma.astype(jnp.float32), W).reshape(1, WC)
    beta_wc = jnp.tile(beta.astype(jnp.float32), W)                           # (WC,)
    if t is None:
        bt = jnp.broadcast_to(beta_wc, (N, WC)).reshape(N, 1, WC)
    else:
        t_wc = jnp.tile(t.reshape(N, Cout).astype(jnp.float32), (1, W))       # (N, WC)
        bt = (beta_wc[None, :] + t_wc).reshape(N, 1, WC)

    inv_cnt = 1.0 / float(D * H * W * cpg)
    kernel = functools.partial(cnn_block_kernel, samples=SB, dh=DH, inv_cnt=inv_cnt)

    out = pl.pallas_call(
        kernel,
        out_shape=jax.ShapeDtypeStruct((N, DH, WC), jnp.float32),
        grid_spec=pltpu.PrefetchScalarGridSpec(
            num_scalar_prefetch=0,
            grid=(NB,),
            in_specs=[
                pl.BlockSpec((SB * DH, Kpad), lambda b: (b, 0)),     # im2col LHS
                pl.BlockSpec((Kpad, WC), lambda b: (0, 0)),          # banded weight
                pl.BlockSpec((WC, groups), lambda b: (0, 0)),        # lane->group one-hot
                pl.BlockSpec((groups, WC), lambda b: (0, 0)),        # group->lane broadcast
                pl.BlockSpec((1, WC), lambda b: (0, 0)),             # gamma
                pl.BlockSpec((SB, 1, WC), lambda b: (b, 0, 0)),      # beta + t (per sample)
            ],
            out_specs=pl.BlockSpec((SB, DH, WC), lambda b: (b, 0, 0)),
        ),
        compiler_params=pltpu.CompilerParams(dimension_semantics=("parallel",)),
    )(lhs, rhs, sel, selt, gamma_wc, bt)

    out = out.reshape(N, D, H, W, Cout)
    # TODO(synk): this transpose re-reads/writes the whole output; keep NDHWC downstream
    #             if the consumer allows it.
    return jnp.transpose(out, (0, 4, 1, 2, 3))                               # back to NCDHW


def ref_forward(x, w_pt, gamma, beta, t, groups):
    """Pure-JAX reference matching the PyTorch module semantics (f32)."""
    y = jax.lax.conv_general_dilated(
        x, w_pt, window_strides=(1, 1, 1),
        padding=((1, 1), (1, 1), (1, 1)),
        dimension_numbers=("NCDHW", "OIDHW", "NCDHW"),
        precision=jax.lax.Precision.HIGHEST)
    N, C, D, H, W = y.shape
    yg = y.reshape(N, groups, -1)
    mean = yg.mean(axis=2, keepdims=True)
    var = ((yg - mean) ** 2).mean(axis=2, keepdims=True)
    yn = ((yg - mean) / jnp.sqrt(var + EPS)).reshape(N, C, D, H, W)
    yn = yn * gamma[None, :, None, None, None] + beta[None, :, None, None, None]
    if t is not None:
        yn = yn + t
    return yn * jax.nn.sigmoid(yn)


if __name__ == "__main__":
    key = jax.random.PRNGKey(0)
    k1, k2, k3, k4, k5 = jax.random.split(key, 5)

    N, Cin, Cout, D, H, W, groups = 2, 4, 16, 8, 8, 8, 8

    x = jax.random.normal(k1, (N, Cin, D, H, W), jnp.float32)
    # Deterministic synthetic conv weight (PyTorch layout, kaiming-uniform-ish scale).
    bound = 1.0 / (Cin * 27) ** 0.5
    w_pt = jax.random.uniform(k2, (Cout, Cin, 3, 3, 3), jnp.float32, -bound, bound)
    gamma = 1.0 + 0.1 * jax.random.normal(k4, (Cout,), jnp.float32)
    beta = 0.1 * jax.random.normal(k5, (Cout,), jnp.float32)
    t = 0.1 * jax.random.normal(k3, (N, Cout, 1, 1, 1), jnp.float32)

    out = cnn_block_forward(x, w_pt, gamma, beta, t=t, groups=groups)
    out = jax.block_until_ready(out)
    assert out.shape == (N, Cout, D, H, W)

    # Strict check against a reference fed the same bf16-quantized operands the kernel
    # gives the MXU (isolates kernel correctness from the deliberate bf16 cast).
    x_q = x.astype(jnp.bfloat16).astype(jnp.float32)
    w_q = w_pt.astype(jnp.bfloat16).astype(jnp.float32)
    ref_q = ref_forward(x_q, w_q, gamma, beta, t, groups)
    err_q = float(jnp.max(jnp.abs(out - ref_q)))
    assert err_q < 2e-3, f"max abs error vs bf16-operand reference too large: {err_q}"

    # Loose sanity check against the full-f32 reference (bf16 operand rounding only,
    # amplified through GroupNorm's 1/sqrt(var)).
    ref_f = ref_forward(x, w_pt, gamma, beta, t, groups)
    err_f = float(jnp.max(jnp.abs(out - ref_f)))
    assert err_f < 5e-2, f"max abs error vs f32 reference too large: {err_f}"

    print("KERNEL_OK")
</pallas_src>

<mosaic_0001>
module attributes {stable_mosaic.version = 11 : i64} {
  func.func @cnn_block_kernel(%arg0: i32, %arg1: memref<128x384xbf16, #tpu.memory_space<vmem>>, %arg2: memref<384x128xbf16, #tpu.memory_space<vmem>>, %arg3: memref<128x8xf32, #tpu.memory_space<vmem>>, %arg4: memref<8x128xf32, #tpu.memory_space<vmem>>, %arg5: memref<1x128xf32, #tpu.memory_space<vmem>>, %arg6: memref<2x1x128xf32, #tpu.memory_space<vmem>>, %arg7: memref<2x64x128xf32, #tpu.memory_space<vmem>>) attributes {dimension_semantics = [#tpu.dimension_semantics<parallel>], iteration_bounds = array<i64: 1>, scalar_prefetch = 0 : i64, scratch_operands = 0 : i64, tpu.core_type = #tpu.core_type<tc>, window_params = [{transform_indices = @transform_0, window_bounds = array<i64: 128, 384>}, {pipeline_mode = #tpu.pipeline_mode<synchronous>, transform_indices = @transform_1, window_bounds = array<i64: 384, 128>}, {pipeline_mode = #tpu.pipeline_mode<synchronous>, transform_indices = @transform_2, window_bounds = array<i64: 128, 8>}, {pipeline_mode = #tpu.pipeline_mode<synchronous>, transform_indices = @transform_3, window_bounds = array<i64: 8, 128>}, {pipeline_mode = #tpu.pipeline_mode<synchronous>, transform_indices = @transform_4, window_bounds = array<i64: 1, 128>}, {transform_indices = @transform_5, window_bounds = array<i64: 2, 1, 128>}, {transform_indices = @transform_6, window_bounds = array<i64: 2, 64, 128>}]} {
    %c0 = arith.constant 0 : index
    %c0_0 = arith.constant 0 : index
    %0 = vector.load %arg1[%c0, %c0_0] : memref<128x384xbf16, #tpu.memory_space<vmem>>, vector<128x384xbf16>
    %c0_1 = arith.constant 0 : index
    %c0_2 = arith.constant 0 : index
    %1 = vector.load %arg2[%c0_1, %c0_2] : memref<384x128xbf16, #tpu.memory_space<vmem>>, vector<384x128xbf16>
    %cst = arith.constant dense<0.000000e+00> : vector<128x128xf32>
    %2 = tpu.matmul %0, %1, %cst {dimension_numbers = #tpu.dot_dimension_numbers<[1], [0], [0], [1], [0, 0, 1, 1], [], []>} : vector<128x384xbf16>, vector<384x128xbf16>, vector<128x128xf32> -> vector<128x128xf32>
    %3 = vector.shape_cast %2 : vector<128x128xf32> to vector<2x64x128xf32>
    %cst_3 = arith.constant dense<0.000000e+00> : vector<2x128xf32>
    %4 = vector.multi_reduction <add>, %3, %cst_3 [1] : vector<2x64x128xf32> to vector<2x128xf32>
    %c0_4 = arith.constant 0 : index
    %c0_5 = arith.constant 0 : index
    %5 = vector.load %arg3[%c0_4, %c0_5] : memref<128x8xf32, #tpu.memory_space<vmem>>, vector<128x8xf32>
    %cst_6 = arith.constant dense<0.000000e+00> : vector<2x8xf32>
    %6 = tpu.matmul %4, %5, %cst_6 {dimension_numbers = #tpu.dot_dimension_numbers<[1], [0], [0], [1], [0, 0, 1, 1], [], []>} : vector<2x128xf32>, vector<128x8xf32>, vector<2x8xf32> -> vector<2x8xf32>
    %c0_7 = arith.constant 0 : index
    %c0_8 = arith.constant 0 : index
    %7 = vector.load %arg4[%c0_7, %c0_8] : memref<8x128xf32, #tpu.memory_space<vmem>>, vector<8x128xf32>
    %cst_9 = arith.constant dense<0.000000e+00> : vector<2x128xf32>
    %8 = tpu.matmul %6, %7, %cst_9 {dimension_numbers = #tpu.dot_dimension_numbers<[1], [0], [0], [1], [0, 0, 1, 1], [], []>} : vector<2x8xf32>, vector<8x128xf32>, vector<2x128xf32> -> vector<2x128xf32>
    %cst_10 = arith.constant 9.765625E-4 : f32
    %9 = vector.broadcast %cst_10 : f32 to vector<2x128xf32>
    %10 = arith.mulf %8, %9 : vector<2x128xf32>
    %11 = vector.shape_cast %10 : vector<2x128xf32> to vector<2x1x128xf32>
    %12 = vector.broadcast %11 : vector<2x1x128xf32> to vector<2x64x128xf32>
    %13 = arith.subf %3, %12 : vector<2x64x128xf32>
    %14 = arith.mulf %13, %13 : vector<2x64x128xf32>
    %cst_11 = arith.constant dense<0.000000e+00> : vector<2x128xf32>
    %15 = vector.multi_reduction <add>, %14, %cst_11 [1] : vector<2x64x128xf32> to vector<2x128xf32>
    %c0_12 = arith.constant 0 : index
    %c0_13 = arith.constant 0 : index
    %16 = vector.load %arg3[%c0_12, %c0_13] : memref<128x8xf32, #tpu.memory_space<vmem>>, vector<128x8xf32>
    %cst_14 = arith.constant dense<0.000000e+00> : vector<2x8xf32>
    %17 = tpu.matmul %15, %16, %cst_14 {dimension_numbers = #tpu.dot_dimension_numbers<[1], [0], [0], [1], [0, 0, 1, 1], [], []>} : vector<2x128xf32>, vector<128x8xf32>, vector<2x8xf32> -> vector<2x8xf32>
    %c0_15 = arith.constant 0 : index
    %c0_16 = arith.constant 0 : index
    %18 = vector.load %arg4[%c0_15, %c0_16] : memref<8x128xf32, #tpu.memory_space<vmem>>, vector<8x128xf32>
    %cst_17 = arith.constant dense<0.000000e+00> : vector<2x128xf32>
    %19 = tpu.matmul %17, %18, %cst_17 {dimension_numbers = #tpu.dot_dimension_numbers<[1], [0], [0], [1], [0, 0, 1, 1], [], []>} : vector<2x8xf32>, vector<8x128xf32>, vector<2x128xf32> -> vector<2x128xf32>
    %cst_18 = arith.constant 9.765625E-4 : f32
    %20 = vector.broadcast %cst_18 : f32 to vector<2x128xf32>
    %21 = arith.mulf %19, %20 : vector<2x128xf32>
    %cst_19 = arith.constant 9.99999974E-6 : f32
    %22 = vector.broadcast %cst_19 : f32 to vector<2x128xf32>
    %23 = arith.addf %21, %22 : vector<2x128xf32>
    %24 = math.rsqrt %23 : vector<2x128xf32>
    %25 = vector.shape_cast %24 : vector<2x128xf32> to vector<2x1x128xf32>
    %26 = vector.broadcast %25 : vector<2x1x128xf32> to vector<2x64x128xf32>
    %27 = arith.mulf %13, %26 : vector<2x64x128xf32>
    %c0_20 = arith.constant 0 : index
    %c0_21 = arith.constant 0 : index
    %28 = vector.load %arg5[%c0_20, %c0_21] : memref<1x128xf32, #tpu.memory_space<vmem>>, vector<1x128xf32>
    %29 = vector.shape_cast %28 : vector<1x128xf32> to vector<1x1x128xf32>
    %30 = vector.broadcast %29 : vector<1x1x128xf32> to vector<2x64x128xf32>
    %31 = arith.mulf %27, %30 : vector<2x64x128xf32>
    %c0_22 = arith.constant 0 : index
    %c0_23 = arith.constant 0 : index
    %c0_24 = arith.constant 0 : index
    %32 = vector.load %arg6[%c0_22, %c0_23, %c0_24] : memref<2x1x128xf32, #tpu.memory_space<vmem>>, vector<2x1x128xf32>
    %33 = vector.broadcast %32 : vector<2x1x128xf32> to vector<2x64x128xf32>
    %34 = arith.addf %31, %33 : vector<2x64x128xf32>
    %35 = arith.negf %34 : vector<2x64x128xf32>
    %36 = math.exp %35 : vector<2x64x128xf32>
    %cst_25 = arith.constant 1.000000e+00 : f32
    %37 = vector.broadcast %cst_25 : f32 to vector<2x64x128xf32>
    %38 = arith.addf %37, %36 : vector<2x64x128xf32>
    %39 = arith.divf %37, %38 : vector<2x64x128xf32>
    %40 = arith.mulf %34, %39 : vector<2x64x128xf32>
    %c0_26 = arith.constant 0 : index
    %c0_27 = arith.constant 0 : index
    %c0_28 = arith.constant 0 : index
    %41 = vector.load %arg7[%c0_26, %c0_27, %c0_28] : memref<2x64x128xf32, #tpu.memory_space<vmem>>, vector<2x64x128xf32>
    tpu.vector_store %arg7[%c0_26, %c0_27, %c0_28], %40 {strides = array<i32>} : memref<2x64x128xf32, #tpu.memory_space<vmem>>, vector<2x64x128xf32>,
    return
  }
  func.func @transform_0(%arg0: i32) -> (i32, i32) {
    %c0_i32 = arith.constant 0 : i32
    %c0_i32_0 = arith.constant 0 : i32
    return %arg0, %c0_i32 : i32, i32
  }
  func.func @transform_1(%arg0: i32) -> (i32, i32) {
    %c0_i32 = arith.constant 0 : i32
    %c0_i32_0 = arith.constant 0 : i32
    %c0_i32_1 = arith.constant 0 : i32
    return %c0_i32, %c0_i32_0 : i32, i32
  }
  func.func @transform_2(%arg0: i32) -> (i32, i32) {
    %c0_i32 = arith.constant 0 : i32
    %c0_i32_0 = arith.constant 0 : i32
    %c0_i32_1 = arith.constant 0 : i32
    return %c0_i32, %c0_i32_0 : i32, i32
  }
  func.func @transform_3(%arg0: i32) -> (i32, i32) {
    %c0_i32 = arith.constant 0 : i32
    %c0_i32_0 = arith.constant 0 : i32
    %c0_i32_1 = arith.constant 0 : i32
    return %c0_i32, %c0_i32_0 : i32, i32
  }
  func.func @transform_4(%arg0: i32) -> (i32, i32) {
    %c0_i32 = arith.constant 0 : i32
    %c0_i32_0 = arith.constant 0 : i32
    %c0_i32_1 = arith.constant 0 : i32
    return %c0_i32, %c0_i32_0 : i32, i32
  }
  func.func @transform_5(%arg0: i32) -> (i32, i32, i32) {
    %c0_i32 = arith.constant 0 : i32
    %c0_i32_0 = arith.constant 0 : i32
    %c0_i32_1 = arith.constant 0 : i32
    return %arg0, %c0_i32, %c0_i32_0 : i32, i32, i32
  }
  func.func @transform_6(%arg0: i32) -> (i32, i32, i32) {
    %c0_i32 = arith.constant 0 : i32
    %c0_i32_0 = arith.constant 0 : i32
    %c0_i32_1 = arith.constant 0 : i32
    return %arg0, %c0_i32, %c0_i32_0 : i32, i32, i32
  }
}

</mosaic_0001>

<llo_original>
// kernel: tpu_custom_call.1
$region0: #{tpu_custom_call.1}
  #allocation0 [shape = 'u32[]', space=smem, size = 0x4, offset = 0x4, fixed_abs, tag = 'smem constant byte address 0x4 - core index']
  #allocation1 [shape = 'u32[144,128]{1,0:T(1,128)}', space=vmem, size = 0x12000, scoped, tag = 'internal scratch']
  %s0 = inlined_call_operand.hbm [shape: bf16[128,384], index: 0, kind: input, shape index: {}]
  %s1 = inlined_call_operand.hbm [shape: bf16[384,128], index: 1, kind: input, shape index: {}]
  %s2 = inlined_call_operand.vmem [shape: f32[128,8], index: 2, kind: input, shape index: {}]
  %s3 = inlined_call_operand.vmem [shape: f32[8,128], index: 3, kind: input, shape index: {}]
  %s4 = inlined_call_operand.vmem [shape: f32[1,128], index: 4, kind: input, shape index: {}]
  %s5 = inlined_call_operand.vmem [shape: f32[2,1,128], index: 5, kind: input, shape index: {}]
  %s6 = inlined_call_operand.hbm [shape: f32[2,64,128], index: 6, kind: output, shape index: {}]
  %s7 = sld [smem:[#allocation0]]
  $region42: #{tpu_custom_call.1} parent=0
    _
  %s9 = ssub.s32 1, %s7
  %s10 = scalar_select 0, %s9, %s7
  $region1: #{tpu_custom_call.1} parent=0
    #allocation2 [shape = 'u8[98304]{0}', space=vmem, size = 0x18000, scoped, tag = 'input window, operand 0, single buffered']
    #allocation3 [shape = 's32[1]{0}', space=sflag, size = 0x4, scoped, tag = 'scoped memory for tpu_custom_call.1']
    #allocation4 [shape = 's32[1]{0}', space=sflag, size = 0x4, scoped, tag = 'scoped memory for tpu_custom_call.1']
    #allocation5 [shape = 'u8[98304]{0}', space=vmem, size = 0x18000, scoped, tag = 'input window, operand 1, single buffered']
    #allocation6 [shape = 's32[1]{0}', space=sflag, size = 0x4, scoped, tag = 'scoped memory for tpu_custom_call.1']
    #allocation7 [shape = 'u8[65536]{0}', space=vmem, size = 0x10000, scoped, tag = 'output window, operand 0, single buffered']
    %11 = vsyncpa [#allocation3], 0
    %12 = vsyncpa [#allocation6], 0
    %13 = vsyncpa [#allocation4], 0
    // Predicated region
    $region2: #{tpu_custom_call.1} parent=1 // pred_check
      _
    $region3: #{tpu_custom_call.1} parent=1 // pred_check_branch
      %15 = sbr.rel (0) target = $region5
    $region4: #{tpu_custom_call.1} parent=1 // pred_region
      %s17 = ssub.s32 3072, 3072
      %18 = vsyncadd [#allocation3], %s17
      %s19 = sshll.u32 [#allocation2], 4
      %s20 = int_to_ptr.vmem [resolvable:$true] %s19
      %25 = dma.hbm_to_vmem [thread:$0]  %s0, 3072, %s20, [#allocation3], 192, 192, 12
    $region5: #{tpu_custom_call.1} parent=1 // pred_fallthru
      _
    // Predicated region
    $region6: #{tpu_custom_call.1} parent=1 // pred_check
      _
    $region7: #{tpu_custom_call.1} parent=1 // pred_check_branch
      %27 = sbr.rel (0) target = $region9
    $region8: #{tpu_custom_call.1} parent=1 // pred_region
      %s29 = ssub.s32 3072, 3072
      %30 = vsyncadd [#allocation6], %s29
      %s31 = sshll.u32 [#allocation5], 4
      %s32 = int_to_ptr.vmem [resolvable:$true] %s31
      %37 = dma.hbm_to_vmem [thread:$0]  %s1, 3072, %s32, [#allocation6], 64, 64, 4
    $region9: #{tpu_custom_call.1} parent=1 // pred_fallthru
      _
    // Predicated region
    $region10: #{tpu_custom_call.1} parent=1 // pred_check
      _
    $region11: #{tpu_custom_call.1} parent=1 // pred_check_branch
      %39 = sbr.rel (0) target = $region13
    $region12: #{tpu_custom_call.1} parent=1 // pred_region
      _
    $region13: #{tpu_custom_call.1} parent=1 // pred_fallthru
      _
    // Predicated region
    $region14: #{tpu_custom_call.1} parent=1 // pred_check
      _
    $region15: #{tpu_custom_call.1} parent=1 // pred_check_branch
      %41 = sbr.rel (0) target = $region17
    $region16: #{tpu_custom_call.1} parent=1 // pred_region
      _
    $region17: #{tpu_custom_call.1} parent=1 // pred_fallthru
      _
    // Predicated region
    $region18: #{tpu_custom_call.1} parent=1 // pred_check
      _
    $region19: #{tpu_custom_call.1} parent=1 // pred_check_branch
      %43 = sbr.rel (0) target = $region21
    $region20: #{tpu_custom_call.1} parent=1 // pred_region
      _
    $region21: #{tpu_custom_call.1} parent=1 // pred_fallthru
      _
    // Predicated region
    $region22: #{tpu_custom_call.1} parent=1 // pred_check
      _
    $region23: #{tpu_custom_call.1} parent=1 // pred_check_branch
      %45 = sbr.rel (0) target = $region25
    $region24: #{tpu_custom_call.1} parent=1 // pred_region
      _
    $region25: #{tpu_custom_call.1} parent=1 // pred_fallthru
      _
    // Predicated region
    $region26: #{tpu_custom_call.1} parent=1 // pred_check
      _
    $region27: #{tpu_custom_call.1} parent=1 // pred_check_branch
      %47 = sbr.rel (0) target = $region29
    $region28: #{tpu_custom_call.1} parent=1 // pred_region
      %48 = dma.done [#allocation3], 3072
    $region29: #{tpu_custom_call.1} parent=1 // pred_fallthru
      _
    // Predicated region
    $region30: #{tpu_custom_call.1} parent=1 // pred_check
      _
    $region31: #{tpu_custom_call.1} parent=1 // pred_check_branch
      %50 = sbr.rel (0) target = $region33
    $region32: #{tpu_custom_call.1} parent=1 // pred_region
      %51 = dma.done [#allocation6], 3072
    $region33: #{tpu_custom_call.1} parent=1 // pred_fallthru
      _
    %v53 = vld [vmem:[#allocation2] sm:$0xff]
    %v54 = vld [vmem:[#allocation2 + $0x8] sm:$0xf]
    %v55 = vld [vmem:[#allocation2 + $0xc] sm:$0xff]
    %v56 = vld [vmem:[#allocation2 + $0x14] sm:$0xf]
    %v57 = vld [vmem:[#allocation2 + $0x18] sm:$0xff]
    %v58 = vld [vmem:[#allocation2 + $0x20] sm:$0xf]
    %v59 = vld [vmem:[#allocation2 + $0x24] sm:$0xff]
    %v60 = vld [vmem:[#allocation2 + $0x2c] sm:$0xf]
    %v61 = vld [vmem:[#allocation2 + $0x30] sm:$0xff]
    %v62 = vld [vmem:[#allocation2 + $0x38] sm:$0xf]
    %v63 = vld [vmem:[#allocation2 + $0x3c] sm:$0xff]
    %v64 = vld [vmem:[#allocation2 + $0x44] sm:$0xf]
    %v65 = vld [vmem:[#allocation2 + $0x48] sm:$0xff]
    %v66 = vld [vmem:[#allocation2 + $0x50] sm:$0xf]
    %v67 = vld [vmem:[#allocation2 + $0x54] sm:$0xff]
    %v68 = vld [vmem:[#allocation2 + $0x5c] sm:$0xf]
    %v69 = vld [vmem:[#allocation2 + $0x60] sm:$0xff]
    %v70 = vld [vmem:[#allocation2 + $0x68] sm:$0xf]
    %v71 = vld [vmem:[#allocation2 + $0x6c] sm:$0xff]
    %v72 = vld [vmem:[#allocation2 + $0x74] sm:$0xf]
    %v73 = vld [vmem:[#allocation2 + $0x78] sm:$0xff]
    %v74 = vld [vmem:[#allocation2 + $0x80] sm:$0xf]
    %v75 = vld [vmem:[#allocation2 + $0x84] sm:$0xff]
    %v76 = vld [vmem:[#allocation2 + $0x8c] sm:$0xf]
    %v77 = vld [vmem:[#allocation2 + $0x90] sm:$0xff]
    %v78 = vld [vmem:[#allocation2 + $0x98] sm:$0xf]
    %v79 = vld [vmem:[#allocation2 + $0x9c] sm:$0xff]
    %v80 = vld [vmem:[#allocation2 + $0xa4] sm:$0xf]
    %v81 = vld [vmem:[#allocation2 + $0xa8] sm:$0xff]
    %v82 = vld [vmem:[#allocation2 + $0xb0] sm:$0xf]
    %v83 = vld [vmem:[#allocation2 + $0xb4] sm:$0xff]
    %v84 = vld [vmem:[#allocation2 + $0xbc] sm:$0xf]
    %v85 = vld [vmem:[#allocation5] sm:$0xf]
    %v86 = vld [vmem:[#allocation5 + $0x4] sm:$0xf]
    %v87 = vld [vmem:[#allocation5 + $0x8] sm:$0xf]
    %v88 = vld [vmem:[#allocation5 + $0xc] sm:$0xf]
    %v89 = vld [vmem:[#allocation5 + $0x10] sm:$0xf]
    %v90 = vld [vmem:[#allocation5 + $0x14] sm:$0xf]
    %v91 = vld [vmem:[#allocation5 + $0x18] sm:$0xf]
    %v92 = vld [vmem:[#allocation5 + $0x1c] sm:$0xf]
    %v93 = vld [vmem:[#allocation5 + $0x20] sm:$0xf]
    %v94 = vld [vmem:[#allocation5 + $0x24] sm:$0xf]
    %v95 = vld [vmem:[#allocation5 + $0x28] sm:$0xf]
    %v96 = vld [vmem:[#allocation5 + $0x2c] sm:$0xf]
    %v97 = vld [vmem:[#allocation5 + $0x30] sm:$0xf]
    %v98 = vld [vmem:[#allocation5 + $0x34] sm:$0xf]
    %v99 = vld [vmem:[#allocation5 + $0x38] sm:$0xf]
    %v100 = vld [vmem:[#allocation5 + $0x3c] sm:$0xf]
    %v101 = vld [vmem:[#allocation5 + $0x40] sm:$0xf]
    %v102 = vld [vmem:[#allocation5 + $0x44] sm:$0xf]
    %v103 = vld [vmem:[#allocation5 + $0x48] sm:$0xf]
    %v104 = vld [vmem:[#allocation5 + $0x4c] sm:$0xf]
    %v105 = vld [vmem:[#allocation5 + $0x50] sm:$0xf]
    %v106 = vld [vmem:[#allocation5 + $0x54] sm:$0xf]
    %v107 = vld [vmem:[#allocation5 + $0x58] sm:$0xf]
    %v108 = vld [vmem:[#allocation5 + $0x5c] sm:$0xf]
    %v109 = vld [vmem:[#allocation5 + $0x60] sm:$0xf]
    %v110 = vld [vmem:[#allocation5 + $0x64] sm:$0xf]
    %v111 = vld [vmem:[#allocation5 + $0x68] sm:$0xf]
    %v112 = vld [vmem:[#allocation5 + $0x6c] sm:$0xf]
    %v113 = vld [vmem:[#allocation5 + $0x70] sm:$0xf]
    %v114 = vld [vmem:[#allocation5 + $0x74] sm:$0xf]
    %v115 = vld [vmem:[#allocation5 + $0x78] sm:$0xf]
    %v116 = vld [vmem:[#allocation5 + $0x7c] sm:$0xf]
    %v117 = vld [vmem:[#allocation5 + $0x80] sm:$0xf]
    %v118 = vld [vmem:[#allocation5 + $0x84] sm:$0xf]
    %v119 = vld [vmem:[#allocation5 + $0x88] sm:$0xf]
    %v120 = vld [vmem:[#allocation5 + $0x8c] sm:$0xf]
    %v121 = vld [vmem:[#allocation5 + $0x90] sm:$0xf]
    %v122 = vld [vmem:[#allocation5 + $0x94] sm:$0xf]
    %v123 = vld [vmem:[#allocation5 + $0x98] sm:$0xf]
    %v124 = vld [vmem:[#allocation5 + $0x9c] sm:$0xf]
    %v125 = vld [vmem:[#allocation5 + $0xa0] sm:$0xf]
    %v126 = vld [vmem:[#allocation5 + $0xa4] sm:$0xf]
    %v127 = vld [vmem:[#allocation5 + $0xa8] sm:$0xf]
    %v128 = vld [vmem:[#allocation5 + $0xac] sm:$0xf]
    %v129 = vld [vmem:[#allocation5 + $0xb0] sm:$0xf]
    %v130 = vld [vmem:[#allocation5 + $0xb4] sm:$0xf]
    %v131 = vld [vmem:[#allocation5 + $0xb8] sm:$0xf]
    %v132 = vld [vmem:[#allocation5 + $0xbc] sm:$0xf]
    %v165 = vunpack.c.l.b16 %v53
    %v166 = vunpack.c.h.b16 %v53
    %v167 = vunpack.c.l.b16 %v54
    %v168 = vunpack.c.l.b16 %v55
    %v169 = vunpack.c.h.b16 %v55
    %v170 = vunpack.c.l.b16 %v56
    %v171 = vunpack.c.l.b16 %v57
    %v172 = vunpack.c.h.b16 %v57
    %v173 = vunpack.c.l.b16 %v58
    %v174 = vunpack.c.l.b16 %v59
    %v175 = vunpack.c.h.b16 %v59
    %v176 = vunpack.c.l.b16 %v60
    %v177 = vunpack.c.l.b16 %v61
    %v178 = vunpack.c.h.b16 %v61
    %v179 = vunpack.c.l.b16 %v62
    %v180 = vunpack.c.l.b16 %v63
    %v181 = vunpack.c.h.b16 %v63
    %v182 = vunpack.c.l.b16 %v64
    %v183 = vunpack.c.l.b16 %v65
    %v184 = vunpack.c.h.b16 %v65
    %v185 = vunpack.c.l.b16 %v66
    %v186 = vunpack.c.l.b16 %v67
    %v187 = vunpack.c.h.b16 %v67
    %v188 = vunpack.c.l.b16 %v68
    %v189 = vunpack.c.l.b16 %v69
    %v190 = vunpack.c.h.b16 %v69
    %v191 = vunpack.c.l.b16 %v70
    %v192 = vunpack.c.l.b16 %v71
    %v193 = vunpack.c.h.b16 %v71
    %v194 = vunpack.c.l.b16 %v72
    %v195 = vunpack.c.l.b16 %v73
    %v196 = vunpack.c.h.b16 %v73
    %v197 = vunpack.c.l.b16 %v74
    %v198 = vunpack.c.l.b16 %v75
    %v199 = vunpack.c.h.b16 %v75
    %v200 = vunpack.c.l.b16 %v76
    %v201 = vunpack.c.l.b16 %v77
    %v202 = vunpack.c.h.b16 %v77
    %v203 = vunpack.c.l.b16 %v78
    %v204 = vunpack.c.l.b16 %v79
    %v205 = vunpack.c.h.b16 %v79
    %v206 = vunpack.c.l.b16 %v80
    %v207 = vunpack.c.l.b16 %v81
    %v208 = vunpack.c.h.b16 %v81
    %v209 = vunpack.c.l.b16 %v82
    %v210 = vunpack.c.l.b16 %v83
    %v211 = vunpack.c.h.b16 %v83
    %v212 = vunpack.c.l.b16 %v84
    %v213 = vpack.c.b16 %v168, %v165
    %v214 = vpack.c.b16 %v169, %v166
    %v215 = vpack.c.b16 %v170, %v167
    %v216 = vpack.c.b16 %v174, %v171
    %v217 = vpack.c.b16 %v175, %v172
    %v218 = vpack.c.b16 %v176, %v173
    %v219 = vpack.c.b16 %v180, %v177
    %v220 = vpack.c.b16 %v181, %v178
    %v221 = vpack.c.b16 %v182, %v179
    %v222 = vpack.c.b16 %v186, %v183
    %v223 = vpack.c.b16 %v187, %v184
    %v224 = vpack.c.b16 %v188, %v185
    %v225 = vpack.c.b16 %v192, %v189
    %v226 = vpack.c.b16 %v193, %v190
    %v227 = vpack.c.b16 %v194, %v191
    %v228 = vpack.c.b16 %v198, %v195
    %v229 = vpack.c.b16 %v199, %v196
    %v230 = vpack.c.b16 %v200, %v197
    %v231 = vpack.c.b16 %v204, %v201
    %v232 = vpack.c.b16 %v205, %v202
    %v233 = vpack.c.b16 %v206, %v203
    %v234 = vpack.c.b16 %v210, %v207
    %v235 = vpack.c.b16 %v211, %v208
    %v236 = vpack.c.b16 %v212, %v209
    %v309 = vunpack.c.l.b16 %v85
    %v310 = vunpack.c.l.b16 %v86
    %v311 = vunpack.c.l.b16 %v87
    %v312 = vunpack.c.l.b16 %v88
    %v313 = vunpack.c.l.b16 %v89
    %v314 = vunpack.c.l.b16 %v90
    %v315 = vunpack.c.l.b16 %v91
    %v316 = vunpack.c.l.b16 %v92
    %v317 = vunpack.c.l.b16 %v93
    %v318 = vunpack.c.l.b16 %v94
    %v319 = vunpack.c.l.b16 %v95
    %v320 = vunpack.c.l.b16 %v96
    %v321 = vunpack.c.l.b16 %v97
    %v322 = vunpack.c.l.b16 %v98
    %v323 = vunpack.c.l.b16 %v99
    %v324 = vunpack.c.l.b16 %v100
    %v325 = vunpack.c.l.b16 %v101
    %v326 = vunpack.c.l.b16 %v102
    %v327 = vunpack.c.l.b16 %v103
    %v328 = vunpack.c.l.b16 %v104
    %v329 = vunpack.c.l.b16 %v105
    %v330 = vunpack.c.l.b16 %v106
    %v331 = vunpack.c.l.b16 %v107
    %v332 = vunpack.c.l.b16 %v108
    %v333 = vunpack.c.l.b16 %v109
    %v334 = vunpack.c.l.b16 %v110
    %v335 = vunpack.c.l.b16 %v111
    %v336 = vunpack.c.l.b16 %v112
    %v337 = vunpack.c.l.b16 %v113
    %v338 = vunpack.c.l.b16 %v114
    %v339 = vunpack.c.l.b16 %v115
    %v340 = vunpack.c.l.b16 %v116
    %v341 = vunpack.c.l.b16 %v117
    %v342 = vunpack.c.l.b16 %v118
    %v343 = vunpack.c.l.b16 %v119
    %v344 = vunpack.c.l.b16 %v120
    %v345 = vunpack.c.l.b16 %v121
    %v346 = vunpack.c.l.b16 %v122
    %v347 = vunpack.c.l.b16 %v123
    %v348 = vunpack.c.l.b16 %v124
    %v349 = vunpack.c.l.b16 %v125
    %v350 = vunpack.c.l.b16 %v126
    %v351 = vunpack.c.l.b16 %v127
    %v352 = vunpack.c.l.b16 %v128
    %v353 = vunpack.c.l.b16 %v129
    %v354 = vunpack.c.l.b16 %v130
    %v355 = vunpack.c.l.b16 %v131
    %v356 = vunpack.c.l.b16 %v132
    %v357 = vpack.c.b16 %v310, %v309
    %v358 = vpack.c.b16 %v312, %v311
    %v359 = vpack.c.b16 %v314, %v313
    %v360 = vpack.c.b16 %v316, %v315
    %v361 = vpack.c.b16 %v318, %v317
    %v362 = vpack.c.b16 %v320, %v319
    %v363 = vpack.c.b16 %v322, %v321
    %v364 = vpack.c.b16 %v324, %v323
    %v365 = vpack.c.b16 %v326, %v325
    %v366 = vpack.c.b16 %v328, %v327
    %v367 = vpack.c.b16 %v330, %v329
    %v368 = vpack.c.b16 %v332, %v331
    %v369 = vpack.c.b16 %v334, %v333
    %v370 = vpack.c.b16 %v336, %v335
    %v371 = vpack.c.b16 %v338, %v337
    %v372 = vpack.c.b16 %v340, %v339
    %v373 = vpack.c.b16 %v342, %v341
    %v374 = vpack.c.b16 %v344, %v343
    %v375 = vpack.c.b16 %v346, %v345
    %v376 = vpack.c.b16 %v348, %v347
    %v377 = vpack.c.b16 %v350, %v349
    %v378 = vpack.c.b16 %v352, %v351
    %v379 = vpack.c.b16 %v354, %v353
    %v380 = vpack.c.b16 %v356, %v355
    %405 = vmatprep.subr.bf16.mxu0 0
    %406 = vmatpush1.bf16.msra.mxu0 %v364
    %407 = vmatprep.subr.bf16.mxu0 0
    %408 = vmatpush1.bf16.msra.mxu0 %v363
    %409 = vmatprep.subr.bf16.mxu0 0
    %410 = vmatpush1.bf16.msra.mxu0 %v362
    %411 = vmatprep.subr.bf16.mxu0 0
    %412 = vmatpush1.bf16.msra.mxu0 %v361
    %413 = vmatprep.subr.bf16.mxu0 0
    %414 = vmatpush1.bf16.msra.mxu0 %v360
    %415 = vmatprep.subr.bf16.mxu0 0
    %416 = vmatpush1.bf16.msra.mxu0 %v359
    %417 = vmatprep.subr.bf16.mxu0 0
    %418 = vmatpush1.bf16.msra.mxu0 %v358
    %419 = vmatprep.subr.bf16.mxu0 0
    %420 = vmatpush1.bf16.msra.mxu0 %v357
    %421 = vmatprep.subr.bf16.mxu0 0
    %422 = vmatpush2.bf16.msra.mxu0 %v372
    %423 = vmatprep.subr.bf16.mxu0 0
    %424 = vmatpush2.bf16.msra.mxu0 %v371
    %425 = vmatprep.subr.bf16.mxu0 0
    %426 = vmatpush2.bf16.msra.mxu0 %v370
    %427 = vmatprep.subr.bf16.mxu0 0
    %428 = vmatpush2.bf16.msra.mxu0 %v369
    %429 = vmatprep.subr.bf16.mxu0 0
    %430 = vmatpush2.bf16.msra.mxu0 %v368
    %431 = vmatprep.subr.bf16.mxu0 0
    %432 = vmatpush2.bf16.msra.mxu0 %v367
    %433 = vmatprep.subr.bf16.mxu0 0
    %434 = vmatpush2.bf16.msra.mxu0 %v366
    %435 = vmatprep.subr.bf16.mxu0 0
    %436 = vmatpush2.bf16.msra.mxu0 %v365
    %437 = vmatprep.mubr.bf16.mxu0 %v214
    %438 = vmatmul.mubr.bf16.gmra.mxu0 %v213
    %v439 = vpop.f32.mrf.mxu0
    %v440 = vadd.f32 0.0, %v439
    %v441 = vpop.f32.mrf.mxu0
    %v442 = vpop.f32.mrf.mxu0
    %v443 = vadd.f32 0.0, %v442
    %v444 = vpop.f32.mrf.mxu0
    %445 = vmatprep.mubr.bf16.mxu0 %v217
    %446 = vmatmul.mubr.bf16.gmra.mxu0 %v216
    %v447 = vpop.f32.mrf.mxu0
    %v448 = vadd.f32 0.0, %v447
    %v449 = vpop.f32.mrf.mxu0
    %v450 = vpop.f32.mrf.mxu0
    %v451 = vadd.f32 0.0, %v450
    %v452 = vpop.f32.mrf.mxu0
    %453 = vmatprep.mubr.bf16.mxu0 %v220
    %454 = vmatmul.mubr.bf16.gmra.mxu0 %v219
    %v455 = vpop.f32.mrf.mxu0
    %v456 = vadd.f32 0.0, %v455
    %v457 = vpop.f32.mrf.mxu0
    %v458 = vpop.f32.mrf.mxu0
    %v459 = vadd.f32 0.0, %v458
    %v460 = vpop.f32.mrf.mxu0
    %461 = vmatprep.mubr.bf16.mxu0 %v223
    %462 = vmatmul.mubr.bf16.gmra.mxu0 %v222
    %v463 = vpop.f32.mrf.mxu0
    %v464 = vadd.f32 0.0, %v463
    %v465 = vpop.f32.mrf.mxu0
    %v466 = vpop.f32.mrf.mxu0
    %v467 = vadd.f32 0.0, %v466
    %v468 = vpop.f32.mrf.mxu0
    %469 = vmatprep.mubr.bf16.mxu0 %v226
    %470 = vmatmul.mubr.bf16.gmra.mxu0 %v225
    %v471 = vpop.f32.mrf.mxu0
    %v472 = vadd.f32 0.0, %v471
    %v473 = vpop.f32.mrf.mxu0
    %v474 = vpop.f32.mrf.mxu0
    %v475 = vadd.f32 0.0, %v474
    %v476 = vpop.f32.mrf.mxu0
    %477 = vmatprep.mubr.bf16.mxu0 %v229
    %478 = vmatmul.mubr.bf16.gmra.mxu0 %v228
    %v479 = vpop.f32.mrf.mxu0
    %v480 = vadd.f32 0.0, %v479
    %v481 = vpop.f32.mrf.mxu0
    %v482 = vpop.f32.mrf.mxu0
    %v483 = vadd.f32 0.0, %v482
    %v484 = vpop.f32.mrf.mxu0
    %485 = vmatprep.mubr.bf16.mxu0 %v232
    %486 = vmatmul.mubr.bf16.gmra.mxu0 %v231
    %v487 = vpop.f32.mrf.mxu0
    %v488 = vadd.f32 0.0, %v487
    %v489 = vpop.f32.mrf.mxu0
    %v490 = vpop.f32.mrf.mxu0
    %v491 = vadd.f32 0.0, %v490
    %v492 = vpop.f32.mrf.mxu0
    %493 = vmatprep.mubr.bf16.mxu0 %v235
    %494 = vmatmul.mubr.bf16.gmra.mxu0 %v234
    %v495 = vpop.f32.mrf.mxu0
    %v496 = vadd.f32 0.0, %v495
    %v497 = vpop.f32.mrf.mxu0
    %v498 = vpop.f32.mrf.mxu0
    %v499 = vadd.f32 0.0, %v498
    %v500 = vpop.f32.mrf.mxu0
    %501 = vdwg.mxu0
    %502 = vmatprep.subr.bf16.mxu0 0
    %503 = vmatpush1.bf16.msra.mxu0 %v380
    %504 = vmatprep.subr.bf16.mxu0 0
    %505 = vmatpush1.bf16.msra.mxu0 %v379
    %506 = vmatprep.subr.bf16.mxu0 0
    %507 = vmatpush1.bf16.msra.mxu0 %v378
    %508 = vmatprep.subr.bf16.mxu0 0
    %509 = vmatpush1.bf16.msra.mxu0 %v377
    %510 = vmatprep.subr.bf16.mxu0 0
    %511 = vmatpush1.bf16.msra.mxu0 %v376
    %512 = vmatprep.subr.bf16.mxu0 0
    %513 = vmatpush1.bf16.msra.mxu0 %v375
    %514 = vmatprep.subr.bf16.mxu0 0
    %515 = vmatpush1.bf16.msra.mxu0 %v374
    %516 = vmatprep.subr.bf16.mxu0 0
    %517 = vmatpush1.bf16.msra.mxu0 %v373
    %518 = vmatprep.subr.bf16.mxu0 0
    %519 = vmatpush2.bf16.msra.mxu0 0
    %520 = vmatprep.subr.bf16.mxu0 0
    %521 = vmatpush2.bf16.msra.mxu0 0
    %522 = vmatprep.subr.bf16.mxu0 0
    %523 = vmatpush2.bf16.msra.mxu0 0
    %524 = vmatprep.subr.bf16.mxu0 0
    %525 = vmatpush2.bf16.msra.mxu0 0
    %526 = vmatprep.subr.bf16.mxu0 0
    %527 = vmatpush2.bf16.msra.mxu0 0
    %528 = vmatprep.subr.bf16.mxu0 0
    %529 = vmatpush2.bf16.msra.mxu0 0
    %530 = vmatprep.subr.bf16.mxu0 0
    %531 = vmatpush2.bf16.msra.mxu0 0
    %532 = vmatprep.subr.bf16.mxu0 0
    %533 = vmatpush2.bf16.msra.mxu0 0
    %534 = vmatprep.mubr.bf16.mxu0 0
    %535 = vmatmul.mubr.bf16.gmra.mxu0 %v215
    %v536 = vpop.f32.mrf.mxu0
    %v537 = vadd.f32 %v440, %v536
    %v538 = vpop.f32.mrf.mxu0
    %v539 = vpop.f32.mrf.mxu0
    %v540 = vadd.f32 %v443, %v539
    %v541 = vpop.f32.mrf.mxu0
    %542 = vmatprep.mubr.bf16.mxu0 0
    %543 = vmatmul.mubr.bf16.gmra.mxu0 %v218
    %v544 = vpop.f32.mrf.mxu0
    %v545 = vadd.f32 %v448, %v544
    %v546 = vpop.f32.mrf.mxu0
    %v547 = vpop.f32.mrf.mxu0
    %v548 = vadd.f32 %v451, %v547
    %v549 = vpop.f32.mrf.mxu0
    %550 = vmatprep.mubr.bf16.mxu0 0
    %551 = vmatmul.mubr.bf16.gmra.mxu0 %v221
    %v552 = vpop.f32.mrf.mxu0
    %v553 = vadd.f32 %v456, %v552
    %v554 = vpop.f32.mrf.mxu0
    %v555 = vpop.f32.mrf.mxu0
    %v556 = vadd.f32 %v459, %v555
    %v557 = vpop.f32.mrf.mxu0
    %558 = vmatprep.mubr.bf16.mxu0 0
    %559 = vmatmul.mubr.bf16.gmra.mxu0 %v224
    %v560 = vpop.f32.mrf.mxu0
    %v561 = vadd.f32 %v464, %v560
    %v562 = vpop.f32.mrf.mxu0
    %v563 = vpop.f32.mrf.mxu0
    %v564 = vadd.f32 %v467, %v563
    %v565 = vpop.f32.mrf.mxu0
    %566 = vmatprep.mubr.bf16.mxu0 0
    %567 = vmatmul.mubr.bf16.gmra.mxu0 %v227
    %v568 = vpop.f32.mrf.mxu0
    %v569 = vadd.f32 %v472, %v568
    %v570 = vpop.f32.mrf.mxu0
    %v571 = vpop.f32.mrf.mxu0
    %v572 = vadd.f32 %v475, %v571
    %v573 = vpop.f32.mrf.mxu0
    %574 = vmatprep.mubr.bf16.mxu0 0
    %575 = vmatmul.mubr.bf16.gmra.mxu0 %v230
    %v576 = vpop.f32.mrf.mxu0
    %v577 = vadd.f32 %v480, %v576
    %v578 = vpop.f32.mrf.mxu0
    %v579 = vpop.f32.mrf.mxu0
    %v580 = vadd.f32 %v483, %v579
    %v581 = vpop.f32.mrf.mxu0
    %582 = vmatprep.mubr.bf16.mxu0 0
    %583 = vmatmul.mubr.bf16.gmra.mxu0 %v233
    %v584 = vpop.f32.mrf.mxu0
    %v585 = vadd.f32 %v488, %v584
    %v586 = vpop.f32.mrf.mxu0
    %v587 = vpop.f32.mrf.mxu0
    %v588 = vadd.f32 %v491, %v587
    %v589 = vpop.f32.mrf.mxu0
    %590 = vmatprep.mubr.bf16.mxu0 0
    %591 = vmatmul.mubr.bf16.gmra.mxu0 %v236
    %v592 = vpop.f32.mrf.mxu0
    %v593 = vadd.f32 %v496, %v592
    %v594 = vpop.f32.mrf.mxu0
    %v595 = vpop.f32.mrf.mxu0
    %v596 = vadd.f32 %v499, %v595
    %v597 = vpop.f32.mrf.mxu0
    %598 = vdwg.mxu0
    %v599 = vadd.f32 %v537, %v540
    %v600 = vadd.f32 %v599, %v545
    %v601 = vadd.f32 %v600, %v548
    %v602 = vadd.f32 %v601, %v553
    %v603 = vadd.f32 %v602, %v556
    %v604 = vadd.f32 %v603, %v561
    %v605 = vadd.f32 %v604, %v564
    %v606 = vrot.slane %v605, 4
    %v607 = vadd.f32 %v605, %v606
    %v608 = vrot.slane %v607, 2
    %v609 = vadd.f32 %v607, %v608
    %v610 = vrot.slane %v609, 1
    %v611 = vadd.f32 %v609, %v610
    %v612 = vadd.f32 %v569, %v572
    %v613 = vadd.f32 %v612, %v577
    %v614 = vadd.f32 %v613, %v580
    %v615 = vadd.f32 %v614, %v585
    %v616 = vadd.f32 %v615, %v588
    %v617 = vadd.f32 %v616, %v593
    %v618 = vadd.f32 %v617, %v596
    %v619 = vrot.slane %v618, 4
    %v620 = vadd.f32 %v618, %v619
    %v621 = vrot.slane %v620, 2
    %v622 = vadd.f32 %v620, %v621
    %v623 = vrot.slane %v622, 1
    %v624 = vadd.f32 %v622, %v623
    %v625 = vld [vmem:[%s2] sm:$0xff]
    %v626 = vld [vmem:[%s2 + $0x8] sm:$0xff]
    %v627 = vld [vmem:[%s2 + $0x10] sm:$0xff]
    %v628 = vld [vmem:[%s2 + $0x18] sm:$0xff]
    %v629 = vld [vmem:[%s2 + $0x20] sm:$0xff]
    %v630 = vld [vmem:[%s2 + $0x28] sm:$0xff]
    %v631 = vld [vmem:[%s2 + $0x30] sm:$0xff]
    %v632 = vld [vmem:[%s2 + $0x38] sm:$0xff]
    %v633 = vld [vmem:[%s2 + $0x40] sm:$0xff]
    %v634 = vld [vmem:[%s2 + $0x48] sm:$0xff]
    %v635 = vld [vmem:[%s2 + $0x50] sm:$0xff]
    %v636 = vld [vmem:[%s2 + $0x58] sm:$0xff]
    %v637 = vld [vmem:[%s2 + $0x60] sm:$0xff]
    %v638 = vld [vmem:[%s2 + $0x68] sm:$0xff]
    %v639 = vld [vmem:[%s2 + $0x70] sm:$0xff]
    %v640 = vld [vmem:[%s2 + $0x78] sm:$0xff]
    %vm643 = vcmask 1041409
    %v644 = vsel %vm643, %v624, %v611
    %646 = vmatprep.subr.mxu0 0.0
    %647 = vmatpush1.msra.mxu0 %v640
    %648 = vmatprep.subr.mxu0 0.0
    %649 = vmatpush1.msra.mxu0 %v639
    %650 = vmatprep.subr.mxu0 0.0
    %651 = vmatpush1.msra.mxu0 %v638
    %652 = vmatprep.subr.mxu0 0.0
    %653 = vmatpush1.msra.mxu0 %v637
    %654 = vmatprep.subr.mxu0 0.0
    %655 = vmatpush1.msra.mxu0 %v636
    %656 = vmatprep.subr.mxu0 0.0
    %657 = vmatpush1.msra.mxu0 %v635
    %658 = vmatprep.subr.mxu0 0.0
    %659 = vmatpush1.msra.mxu0 %v634
    %660 = vmatprep.subr.mxu0 0.0
    %661 = vmatpush1.msra.mxu0 %v633
    %662 = vmatprep.subr.mxu0 0.0
    %663 = vmatpush1.msra.mxu0 %v632
    %664 = vmatprep.subr.mxu0 0.0
    %665 = vmatpush1.msra.mxu0 %v631
    %666 = vmatprep.subr.mxu0 0.0
    %667 = vmatpush1.msra.mxu0 %v630
    %668 = vmatprep.subr.mxu0 0.0
    %669 = vmatpush1.msra.mxu0 %v629
    %670 = vmatprep.subr.mxu0 0.0
    %671 = vmatpush1.msra.mxu0 %v628
    %672 = vmatprep.subr.mxu0 0.0
    %673 = vmatpush1.msra.mxu0 %v627
    %674 = vmatprep.subr.mxu0 0.0
    %675 = vmatpush1.msra.mxu0 %v626
    %676 = vmatprep.subr.mxu0 0.0
    %677 = vmatpush1.msra.mxu0 %v625
    %678 = vmatprep.subr.mxu0 0.0
    %679 = vmatpush2.msra.mxu0 0.0
    %680 = vmatprep.subr.mxu0 0.0
    %681 = vmatpush2.msra.mxu0 0.0
    %682 = vmatprep.subr.mxu0 0.0
    %683 = vmatpush2.msra.mxu0 0.0
    %684 = vmatprep.subr.mxu0 0.0
    %685 = vmatpush2.msra.mxu0 0.0
    %686 = vmatprep.subr.mxu0 0.0
    %687 = vmatpush2.msra.mxu0 0.0
    %688 = vmatprep.subr.mxu0 0.0
    %689 = vmatpush2.msra.mxu0 0.0
    %690 = vmatprep.subr.mxu0 0.0
    %691 = vmatpush2.msra.mxu0 0.0
    %692 = vmatprep.subr.mxu0 0.0
    %693 = vmatpush2.msra.mxu0 0.0
    %694 = vmatprep.subr.mxu0 0.0
    %695 = vmatpush2.msra.mxu0 0.0
    %696 = vmatprep.subr.mxu0 0.0
    %697 = vmatpush2.msra.mxu0 0.0
    %698 = vmatprep.subr.mxu0 0.0
    %699 = vmatpush2.msra.mxu0 0.0
    %700 = vmatprep.subr.mxu0 0.0
    %701 = vmatpush2.msra.mxu0 0.0
    %702 = vmatprep.subr.mxu0 0.0
    %703 = vmatpush2.msra.mxu0 0.0
    %704 = vmatprep.subr.mxu0 0.0
    %705 = vmatpush2.msra.mxu0 0.0
    %706 = vmatprep.subr.mxu0 0.0
    %707 = vmatpush2.msra.mxu0 0.0
    %708 = vmatprep.subr.mxu0 0.0
    %709 = vmatpush2.msra.mxu0 0.0
    %710 = vmatprep.mubr.f32.mxu0 0.0
    %711 = vmatmul.mubr.f32.gmra.mxu0 %v644
    %v712 = vpop.f32.mrf.mxu0
    %v713 = vadd.f32 0.0, %v712
    %v714 = vpop.f32.mrf.mxu0
    %715 = vdwg.mxu0
    %v716 = vld [vmem:[%s3] sm:$0xff]
    %vm717 = vcmask 64512
    %v719 = vsel %vm717, %v713, 0
    %721 = vmatprep.subr.mxu0 0.0
    %722 = vmatpush1.msra.mxu0 0.0
    %723 = vmatprep.subr.mxu0 0.0
    %724 = vmatpush1.msra.mxu0 0.0
    %725 = vmatprep.subr.mxu0 0.0
    %726 = vmatpush1.msra.mxu0 0.0
    %727 = vmatprep.subr.mxu0 0.0
    %728 = vmatpush1.msra.mxu0 0.0
    %729 = vmatprep.subr.mxu0 0.0
    %730 = vmatpush1.msra.mxu0 0.0
    %731 = vmatprep.subr.mxu0 0.0
    %732 = vmatpush1.msra.mxu0 0.0
    %733 = vmatprep.subr.mxu0 0.0
    %734 = vmatpush1.msra.mxu0 0.0
    %735 = vmatprep.subr.mxu0 0.0
    %736 = vmatpush1.msra.mxu0 0.0
    %737 = vmatprep.subr.mxu0 0.0
    %738 = vmatpush1.msra.mxu0 0.0
    %739 = vmatprep.subr.mxu0 0.0
    %740 = vmatpush1.msra.mxu0 0.0
    %741 = vmatprep.subr.mxu0 0.0
    %742 = vmatpush1.msra.mxu0 0.0
    %743 = vmatprep.subr.mxu0 0.0
    %744 = vmatpush1.msra.mxu0 0.0
    %745 = vmatprep.subr.mxu0 0.0
    %746 = vmatpush1.msra.mxu0 0.0
    %747 = vmatprep.subr.mxu0 0.0
    %748 = vmatpush1.msra.mxu0 0.0
    %749 = vmatprep.subr.mxu0 0.0
    %750 = vmatpush1.msra.mxu0 0.0
    %751 = vmatprep.subr.mxu0 0.0
    %752 = vmatpush1.msra.mxu0 %v716
    %753 = vmatprep.subr.mxu0 0.0
    %754 = vmatpush2.msra.mxu0 0.0
    %755 = vmatprep.subr.mxu0 0.0
    %756 = vmatpush2.msra.mxu0 0.0
    %757 = vmatprep.subr.mxu0 0.0
    %758 = vmatpush2.msra.mxu0 0.0
    %759 = vmatprep.subr.mxu0 0.0
    %760 = vmatpush2.msra.mxu0 0.0
    %761 = vmatprep.subr.mxu0 0.0
    %762 = vmatpush2.msra.mxu0 0.0
    %763 = vmatprep.subr.mxu0 0.0
    %764 = vmatpush2.msra.mxu0 0.0
    %765 = vmatprep.subr.mxu0 0.0
    %766 = vmatpush2.msra.mxu0 0.0
    %767 = vmatprep.subr.mxu0 0.0
    %768 = vmatpush2.msra.mxu0 0.0
    %769 = vmatprep.subr.mxu0 0.0
    %770 = vmatpush2.msra.mxu0 0.0
    %771 = vmatprep.subr.mxu0 0.0
    %772 = vmatpush2.msra.mxu0 0.0
    %773 = vmatprep.subr.mxu0 0.0
    %774 = vmatpush2.msra.mxu0 0.0
    %775 = vmatprep.subr.mxu0 0.0
    %776 = vmatpush2.msra.mxu0 0.0
    %777 = vmatprep.subr.mxu0 0.0
    %778 = vmatpush2.msra.mxu0 0.0
    %779 = vmatprep.subr.mxu0 0.0
    %780 = vmatpush2.msra.mxu0 0.0
    %781 = vmatprep.subr.mxu0 0.0
    %782 = vmatpush2.msra.mxu0 0.0
    %783 = vmatprep.subr.mxu0 0.0
    %784 = vmatpush2.msra.mxu0 0.0
    %785 = vmatprep.mubr.f32.mxu0 0.0
    %786 = vmatmul.mubr.f32.gmra.mxu0 %v719
    %v787 = vpop.f32.mrf.mxu0
    %v788 = vadd.f32 0.0, %v787
    %v789 = vpop.f32.mrf.mxu0
    %790 = vdwg.mxu0
    %v791 = vmul.f32 %v788, 0.0009765625
    %v794 = vunpack.c.l.s4 1966171168
    %v795 = vunpack.c.0.s8 %v794
    %v796 = vlaneseq
    %v797 = vshrl.u32 %v796, 7
    %v798 = vsub.s32 %v795, %v797
    %v799 = vrot.slane %v791, %v798
    %v800 = vcombine.high %v799, %v799
    %v802 = vunpack.c.l.s4 1966171168
    %v803 = vunpack.c.0.s8 %v802
    %v804 = vlaneseq
    %v805 = vshrl.u32 %v804, 7
    %v806 = vsub.s32 %v803, %v805
    %v807 = vrot.slane %v799, %v806
    %v809 = vunpack.c.l.s4 1966171168
    %v810 = vunpack.c.0.s8 %v809
    %v811 = vlaneseq
    %v812 = vshrl.u32 %v811, 7
    %v813 = vsub.s32 %v810, %v812
    %v814 = vrot.slane %v800, %v813
    %v815 = vlaneseq
    %v816 = vshrl.u32 %v815, 7
    %v817 = vsub.s32 0, %v816
    %v818 = vrot.slane %v807, %v817
    %v819 = vlaneseq
    %v820 = vshrl.u32 %v819, 7
    %v821 = vsub.s32 0, %v820
    %v822 = vrot.slane %v814, %v821
    %v825 = vsub.f32 %v537, %v818
    %v826 = vsub.f32 %v540, %v818
    %v827 = vsub.f32 %v545, %v818
    %v828 = vsub.f32 %v548, %v818
    %v829 = vsub.f32 %v553, %v818
    %v830 = vsub.f32 %v556, %v818
    %v831 = vsub.f32 %v561, %v818
    %v832 = vsub.f32 %v564, %v818
    %v833 = vsub.f32 %v569, %v822
    %v834 = vsub.f32 %v572, %v822
    %v835 = vsub.f32 %v577, %v822
    %v836 = vsub.f32 %v580, %v822
    %v837 = vsub.f32 %v585, %v822
    %v838 = vsub.f32 %v588, %v822
    %v839 = vsub.f32 %v593, %v822
    %v840 = vsub.f32 %v596, %v822
    %v841 = vmul.f32 %v825, %v825
    %v842 = vmul.f32 %v826, %v826
    %v843 = vmul.f32 %v827, %v827
    %v844 = vmul.f32 %v828, %v828
    %v845 = vmul.f32 %v829, %v829
    %v846 = vmul.f32 %v830, %v830
    %v847 = vmul.f32 %v831, %v831
    %v848 = vmul.f32 %v832, %v832
    %v849 = vmul.f32 %v833, %v833
    %v850 = vmul.f32 %v834, %v834
    %v851 = vmul.f32 %v835, %v835
    %v852 = vmul.f32 %v836, %v836
    %v853 = vmul.f32 %v837, %v837
    %v854 = vmul.f32 %v838, %v838
    %v855 = vmul.f32 %v839, %v839
    %v856 = vmul.f32 %v840, %v840
    %v857 = vadd.f32 %v841, %v842
    %v858 = vadd.f32 %v857, %v843
    %v859 = vadd.f32 %v858, %v844
    %v860 = vadd.f32 %v859, %v845
    %v861 = vadd.f32 %v860, %v846
    %v862 = vadd.f32 %v861, %v847
    %v863 = vadd.f32 %v862, %v848
    %v864 = vrot.slane %v863, 4
    %v865 = vadd.f32 %v863, %v864
    %v866 = vrot.slane %v865, 2
    %v867 = vadd.f32 %v865, %v866
    %v868 = vrot.slane %v867, 1
    %v869 = vadd.f32 %v867, %v868
    %v870 = vadd.f32 %v849, %v850
    %v871 = vadd.f32 %v870, %v851
    %v872 = vadd.f32 %v871, %v852
    %v873 = vadd.f32 %v872, %v853
    %v874 = vadd.f32 %v873, %v854
    %v875 = vadd.f32 %v874, %v855
    %v876 = vadd.f32 %v875, %v856
    %v877 = vrot.slane %v876, 4
    %v878 = vadd.f32 %v876, %v877
    %v879 = vrot.slane %v878, 2
    %v880 = vadd.f32 %v878, %v879
    %v881 = vrot.slane %v880, 1
    %v882 = vadd.f32 %v880, %v881
    %v885 = vsel %vm643, %v882, %v869
    %887 = vmatprep.subr.mxu0 0.0
    %888 = vmatpush1.msra.mxu0 %v640
    %889 = vmatprep.subr.mxu0 0.0
    %890 = vmatpush1.msra.mxu0 %v639
    %891 = vmatprep.subr.mxu0 0.0
    %892 = vmatpush1.msra.mxu0 %v638
    %893 = vmatprep.subr.mxu0 0.0
    %894 = vmatpush1.msra.mxu0 %v637
    %895 = vmatprep.subr.mxu0 0.0
    %896 = vmatpush1.msra.mxu0 %v636
    %897 = vmatprep.subr.mxu0 0.0
    %898 = vmatpush1.msra.mxu0 %v635
    %899 = vmatprep.subr.mxu0 0.0
    %900 = vmatpush1.msra.mxu0 %v634
    %901 = vmatprep.subr.mxu0 0.0
    %902 = vmatpush1.msra.mxu0 %v633
    %903 = vmatprep.subr.mxu0 0.0
    %904 = vmatpush1.msra.mxu0 %v632
    %905 = vmatprep.subr.mxu0 0.0
    %906 = vmatpush1.msra.mxu0 %v631
    %907 = vmatprep.subr.mxu0 0.0
    %908 = vmatpush1.msra.mxu0 %v630
    %909 = vmatprep.subr.mxu0 0.0
    %910 = vmatpush1.msra.mxu0 %v629
    %911 = vmatprep.subr.mxu0 0.0
    %912 = vmatpush1.msra.mxu0 %v628
    %913 = vmatprep.subr.mxu0 0.0
    %914 = vmatpush1.msra.mxu0 %v627
    %915 = vmatprep.subr.mxu0 0.0
    %916 = vmatpush1.msra.mxu0 %v626
    %917 = vmatprep.subr.mxu0 0.0
    %918 = vmatpush1.msra.mxu0 %v625
    %919 = vmatprep.subr.mxu0 0.0
    %920 = vmatpush2.msra.mxu0 0.0
    %921 = vmatprep.subr.mxu0 0.0
    %922 = vmatpush2.msra.mxu0 0.0
    %923 = vmatprep.subr.mxu0 0.0
    %924 = vmatpush2.msra.mxu0 0.0
    %925 = vmatprep.subr.mxu0 0.0
    %926 = vmatpush2.msra.mxu0 0.0
    %927 = vmatprep.subr.mxu0 0.0
    %928 = vmatpush2.msra.mxu0 0.0
    %929 = vmatprep.subr.mxu0 0.0
    %930 = vmatpush2.msra.mxu0 0.0
    %931 = vmatprep.subr.mxu0 0.0
    %932 = vmatpush2.msra.mxu0 0.0
    %933 = vmatprep.subr.mxu0 0.0
    %934 = vmatpush2.msra.mxu0 0.0
    %935 = vmatprep.subr.mxu0 0.0
    %936 = vmatpush2.msra.mxu0 0.0
    %937 = vmatprep.subr.mxu0 0.0
    %938 = vmatpush2.msra.mxu0 0.0
    %939 = vmatprep.subr.mxu0 0.0
    %940 = vmatpush2.msra.mxu0 0.0
    %941 = vmatprep.subr.mxu0 0.0
    %942 = vmatpush2.msra.mxu0 0.0
    %943 = vmatprep.subr.mxu0 0.0
    %944 = vmatpush2.msra.mxu0 0.0
    %945 = vmatprep.subr.mxu0 0.0
    %946 = vmatpush2.msra.mxu0 0.0
    %947 = vmatprep.subr.mxu0 0.0
    %948 = vmatpush2.msra.mxu0 0.0
    %949 = vmatprep.subr.mxu0 0.0
    %950 = vmatpush2.msra.mxu0 0.0
    %951 = vmatprep.mubr.f32.mxu0 0.0
    %952 = vmatmul.mubr.f32.gmra.mxu0 %v885
    %v953 = vpop.f32.mrf.mxu0
    %v954 = vadd.f32 0.0, %v953
    %v955 = vpop.f32.mrf.mxu0
    %956 = vdwg.mxu0
    %v958 = vsel %vm717, %v954, 0
    %960 = vmatprep.subr.mxu0 0.0
    %961 = vmatpush1.msra.mxu0 0.0
    %962 = vmatprep.subr.mxu0 0.0
    %963 = vmatpush1.msra.mxu0 0.0
    %964 = vmatprep.subr.mxu0 0.0
    %965 = vmatpush1.msra.mxu0 0.0
    %966 = vmatprep.subr.mxu0 0.0
    %967 = vmatpush1.msra.mxu0 0.0
    %968 = vmatprep.subr.mxu0 0.0
    %969 = vmatpush1.msra.mxu0 0.0
    %970 = vmatprep.subr.mxu0 0.0
    %971 = vmatpush1.msra.mxu0 0.0
    %972 = vmatprep.subr.mxu0 0.0
    %973 = vmatpush1.msra.mxu0 0.0
    %974 = vmatprep.subr.mxu0 0.0
    %975 = vmatpush1.msra.mxu0 0.0
    %976 = vmatprep.subr.mxu0 0.0
    %977 = vmatpush1.msra.mxu0 0.0
    %978 = vmatprep.subr.mxu0 0.0
    %979 = vmatpush1.msra.mxu0 0.0
    %980 = vmatprep.subr.mxu0 0.0
    %981 = vmatpush1.msra.mxu0 0.0
    %982 = vmatprep.subr.mxu0 0.0
    %983 = vmatpush1.msra.mxu0 0.0
    %984 = vmatprep.subr.mxu0 0.0
    %985 = vmatpush1.msra.mxu0 0.0
    %986 = vmatprep.subr.mxu0 0.0
    %987 = vmatpush1.msra.mxu0 0.0
    %988 = vmatprep.subr.mxu0 0.0
    %989 = vmatpush1.msra.mxu0 0.0
    %990 = vmatprep.subr.mxu0 0.0
    %991 = vmatpush1.msra.mxu0 %v716
    %992 = vmatprep.subr.mxu0 0.0
    %993 = vmatpush2.msra.mxu0 0.0
    %994 = vmatprep.subr.mxu0 0.0
    %995 = vmatpush2.msra.mxu0 0.0
    %996 = vmatprep.subr.mxu0 0.0
    %997 = vmatpush2.msra.mxu0 0.0
    %998 = vmatprep.subr.mxu0 0.0
    %999 = vmatpush2.msra.mxu0 0.0
    %1000 = vmatprep.subr.mxu0 0.0
    %1001 = vmatpush2.msra.mxu0 0.0
    %1002 = vmatprep.subr.mxu0 0.0
    %1003 = vmatpush2.msra.mxu0 0.0
    %1004 = vmatprep.subr.mxu0 0.0
    %1005 = vmatpush2.msra.mxu0 0.0
    %1006 = vmatprep.subr.mxu0 0.0
    %1007 = vmatpush2.msra.mxu0 0.0
    %1008 = vmatprep.subr.mxu0 0.0
    %1009 = vmatpush2.msra.mxu0 0.0
    %1010 = vmatprep.subr.mxu0 0.0
    %1011 = vmatpush2.msra.mxu0 0.0
    %1012 = vmatprep.subr.mxu0 0.0
    %1013 = vmatpush2.msra.mxu0 0.0
    %1014 = vmatprep.subr.mxu0 0.0
    %1015 = vmatpush2.msra.mxu0 0.0
    %1016 = vmatprep.subr.mxu0 0.0
    %1017 = vmatpush2.msra.mxu0 0.0
    %1018 = vmatprep.subr.mxu0 0.0
    %1019 = vmatpush2.msra.mxu0 0.0
    %1020 = vmatprep.subr.mxu0 0.0
    %1021 = vmatpush2.msra.mxu0 0.0
    %1022 = vmatprep.subr.mxu0 0.0
    %1023 = vmatpush2.msra.mxu0 0.0
    %1024 = vmatprep.mubr.f32.mxu0 0.0
    %1025 = vmatmul.mubr.f32.gmra.mxu0 %v958
    %v1026 = vpop.f32.mrf.mxu0
    %v1027 = vadd.f32 0.0, %v1026
    %v1028 = vpop.f32.mrf.mxu0
    %1029 = vdwg.mxu0
    %v1030 = vmul.f32 %v1027, 0.0009765625
    %v1031 = vadd.f32 %v1030, 1e-05
    %v1032 = vrsqrt.pop %v1031
    %v1035 = vunpack.c.l.s4 1966171168
    %v1036 = vunpack.c.0.s8 %v1035
    %v1037 = vlaneseq
    %v1038 = vshrl.u32 %v1037, 7
    %v1039 = vsub.s32 %v1036, %v1038
    %v1040 = vrot.slane %v1032, %v1039
    %v1041 = vcombine.high %v1040, %v1040
    %v1043 = vunpack.c.l.s4 1966171168
    %v1044 = vunpack.c.0.s8 %v1043
    %v1045 = vlaneseq
    %v1046 = vshrl.u32 %v1045, 7
    %v1047 = vsub.s32 %v1044, %v1046
    %v1048 = vrot.slane %v1040, %v1047
    %v1050 = vunpack.c.l.s4 1966171168
    %v1051 = vunpack.c.0.s8 %v1050
    %v1052 = vlaneseq
    %v1053 = vshrl.u32 %v1052, 7
    %v1054 = vsub.s32 %v1051, %v1053
    %v1055 = vrot.slane %v1041, %v1054
    %v1056 = vlaneseq
    %v1057 = vshrl.u32 %v1056, 7
    %v1058 = vsub.s32 0, %v1057
    %v1059 = vrot.slane %v1048, %v1058
    %v1060 = vlaneseq
    %v1061 = vshrl.u32 %v1060, 7
    %v1062 = vsub.s32 0, %v1061
    %v1063 = vrot.slane %v1055, %v1062
    %v1066 = vmul.f32 %v825, %v1059
    %v1067 = vmul.f32 %v826, %v1059
    %v1068 = vmul.f32 %v827, %v1059
    %v1069 = vmul.f32 %v828, %v1059
    %v1070 = vmul.f32 %v829, %v1059
    %v1071 = vmul.f32 %v830, %v1059
    %v1072 = vmul.f32 %v831, %v1059
    %v1073 = vmul.f32 %v832, %v1059
    %v1074 = vmul.f32 %v833, %v1063
    %v1075 = vmul.f32 %v834, %v1063
    %v1076 = vmul.f32 %v835, %v1063
    %v1077 = vmul.f32 %v836, %v1063
    %v1078 = vmul.f32 %v837, %v1063
    %v1079 = vmul.f32 %v838, %v1063
    %v1080 = vmul.f32 %v839, %v1063
    %v1081 = vmul.f32 %v840, %v1063
    %v1082 = vld [vmem:[%s4] sm:$0x1]
    %v1084 = vlaneseq
    %v1085 = vshrl.u32 %v1084, 7
    %v1086 = vsub.s32 0, %v1085
    %v1087 = vrot.slane %v1082, %v1086
    %v1089 = vmul.f32 %v1066, %v1087
    %v1090 = vmul.f32 %v1067, %v1087
    %v1091 = vmul.f32 %v1068, %v1087
    %v1092 = vmul.f32 %v1069, %v1087
    %v1093 = vmul.f32 %v1070, %v1087
    %v1094 = vmul.f32 %v1071, %v1087
    %v1095 = vmul.f32 %v1072, %v1087
    %v1096 = vmul.f32 %v1073, %v1087
    %v1097 = vmul.f32 %v1074, %v1087
    %v1098 = vmul.f32 %v1075, %v1087
    %v1099 = vmul.f32 %v1076, %v1087
    %v1100 = vmul.f32 %v1077, %v1087
    %v1101 = vmul.f32 %v1078, %v1087
    %v1102 = vmul.f32 %v1079, %v1087
    %v1103 = vmul.f32 %v1080, %v1087
    %v1104 = vmul.f32 %v1081, %v1087
    %v1105 = vld [vmem:[%s5] sm:$0x1]
    %v1106 = vld [vmem:[%s5 + $0x1] sm:$0x1]
    %v1109 = vlaneseq
    %v1110 = vshrl.u32 %v1109, 7
    %v1111 = vsub.s32 0, %v1110
    %v1112 = vrot.slane %v1105, %v1111
    %v1113 = vlaneseq
    %v1114 = vshrl.u32 %v1113, 7
    %v1115 = vsub.s32 0, %v1114
    %v1116 = vrot.slane %v1106, %v1115
    %v1119 = vadd.f32 %v1089, %v1112
    %v1120 = vadd.f32 %v1090, %v1112
    %v1121 = vadd.f32 %v1091, %v1112
    %v1122 = vadd.f32 %v1092, %v1112
    %v1123 = vadd.f32 %v1093, %v1112
    %v1124 = vadd.f32 %v1094, %v1112
    %v1125 = vadd.f32 %v1095, %v1112
    %v1126 = vadd.f32 %v1096, %v1112
    %v1127 = vadd.f32 %v1097, %v1116
    %v1128 = vadd.f32 %v1098, %v1116
    %v1129 = vadd.f32 %v1099, %v1116
    %v1130 = vadd.f32 %v1100, %v1116
    %v1131 = vadd.f32 %v1101, %v1116
    %v1132 = vadd.f32 %v1102, %v1116
    %v1133 = vadd.f32 %v1103, %v1116
    %v1134 = vadd.f32 %v1104, %v1116
    %v1135 = vxor.u32 %v1119, 2147483648
    %v1136 = vxor.u32 %v1120, 2147483648
    %v1137 = vxor.u32 %v1121, 2147483648
    %v1138 = vxor.u32 %v1122, 2147483648
    %v1139 = vxor.u32 %v1123, 2147483648
    %v1140 = vxor.u32 %v1124, 2147483648
    %v1141 = vxor.u32 %v1125, 2147483648
    %v1142 = vxor.u32 %v1126, 2147483648
    %v1143 = vxor.u32 %v1127, 2147483648
    %v1144 = vxor.u32 %v1128, 2147483648
    %v1145 = vxor.u32 %v1129, 2147483648
    %v1146 = vxor.u32 %v1130, 2147483648
    %v1147 = vxor.u32 %v1131, 2147483648
    %v1148 = vxor.u32 %v1132, 2147483648
    %v1149 = vxor.u32 %v1133, 2147483648
    %v1150 = vxor.u32 %v1134, 2147483648
    %v1151 = vmul.f32 %v1135, 1.442695
    %v1152 = vpow.pop %v1151
    %v1153 = vmul.f32 %v1136, 1.442695
    %v1154 = vpow.pop %v1153
    %v1155 = vmul.f32 %v1137, 1.442695
    %v1156 = vpow.pop %v1155
    %v1157 = vmul.f32 %v1138, 1.442695
    %v1158 = vpow.pop %v1157
    %v1159 = vmul.f32 %v1139, 1.442695
    %v1160 = vpow.pop %v1159
    %v1161 = vmul.f32 %v1140, 1.442695
    %v1162 = vpow.pop %v1161
    %v1163 = vmul.f32 %v1141, 1.442695
    %v1164 = vpow.pop %v1163
    %v1165 = vmul.f32 %v1142, 1.442695
    %v1166 = vpow.pop %v1165
    %v1167 = vmul.f32 %v1143, 1.442695
    %v1168 = vpow.pop %v1167
    %v1169 = vmul.f32 %v1144, 1.442695
    %v1170 = vpow.pop %v1169
    %v1171 = vmul.f32 %v1145, 1.442695
    %v1172 = vpow.pop %v1171
    %v1173 = vmul.f32 %v1146, 1.442695
    %v1174 = vpow.pop %v1173
    %v1175 = vmul.f32 %v1147, 1.442695
    %v1176 = vpow.pop %v1175
    %v1177 = vmul.f32 %v1148, 1.442695
    %v1178 = vpow.pop %v1177
    %v1179 = vmul.f32 %v1149, 1.442695
    %v1180 = vpow.pop %v1179
    %v1181 = vmul.f32 %v1150, 1.442695
    %v1182 = vpow.pop %v1181
    %v1183 = vadd.f32 %v1152, 1.0
    %v1184 = vadd.f32 %v1154, 1.0
    %v1185 = vadd.f32 %v1156, 1.0
    %v1186 = vadd.f32 %v1158, 1.0
    %v1187 = vadd.f32 %v1160, 1.0
    %v1188 = vadd.f32 %v1162, 1.0
    %v1189 = vadd.f32 %v1164, 1.0
    %v1190 = vadd.f32 %v1166, 1.0
    %v1191 = vadd.f32 %v1168, 1.0
    %v1192 = vadd.f32 %v1170, 1.0
    %v1193 = vadd.f32 %v1172, 1.0
    %v1194 = vadd.f32 %v1174, 1.0
    %v1195 = vadd.f32 %v1176, 1.0
    %v1196 = vadd.f32 %v1178, 1.0
    %v1197 = vadd.f32 %v1180, 1.0
    %v1198 = vadd.f32 %v1182, 1.0
    %v1199 = vrcp.pop %v1183
    %v1200 = vmul.f32 1.0, %v1199
    %v1201 = vrcp.pop %v1184
    %v1202 = vmul.f32 1.0, %v1201
    %v1203 = vrcp.pop %v1185
    %v1204 = vmul.f32 1.0, %v1203
    %v1205 = vrcp.pop %v1186
    %v1206 = vmul.f32 1.0, %v1205
    %v1207 = vrcp.pop %v1187
    %v1208 = vmul.f32 1.0, %v1207
    %v1209 = vrcp.pop %v1188
    %v1210 = vmul.f32 1.0, %v1209
    %v1211 = vrcp.pop %v1189
    %v1212 = vmul.f32 1.0, %v1211
    %v1213 = vrcp.pop %v1190
    %v1214 = vmul.f32 1.0, %v1213
    %v1215 = vrcp.pop %v1191
    %v1216 = vmul.f32 1.0, %v1215
    %v1217 = vrcp.pop %v1192
    %v1218 = vmul.f32 1.0, %v1217
    %v1219 = vrcp.pop %v1193
    %v1220 = vmul.f32 1.0, %v1219
    %v1221 = vrcp.pop %v1194
    %v1222 = vmul.f32 1.0, %v1221
    %v1223 = vrcp.pop %v1195
    %v1224 = vmul.f32 1.0, %v1223
    %v1225 = vrcp.pop %v1196
    %v1226 = vmul.f32 1.0, %v1225
    %v1227 = vrcp.pop %v1197
    %v1228 = vmul.f32 1.0, %v1227
    %v1229 = vrcp.pop %v1198
    %v1230 = vmul.f32 1.0, %v1229
    %v1231 = vmul.f32 %v1119, %v1200
    %v1232 = vmul.f32 %v1120, %v1202
    %v1233 = vmul.f32 %v1121, %v1204
    %v1234 = vmul.f32 %v1122, %v1206
    %v1235 = vmul.f32 %v1123, %v1208
    %v1236 = vmul.f32 %v1124, %v1210
    %v1237 = vmul.f32 %v1125, %v1212
    %v1238 = vmul.f32 %v1126, %v1214
    %v1239 = vmul.f32 %v1127, %v1216
    %v1240 = vmul.f32 %v1128, %v1218
    %v1241 = vmul.f32 %v1129, %v1220
    %v1242 = vmul.f32 %v1130, %v1222
    %v1243 = vmul.f32 %v1131, %v1224
    %v1244 = vmul.f32 %v1132, %v1226
    %v1245 = vmul.f32 %v1133, %v1228
    %v1246 = vmul.f32 %v1134, %v1230
    %1247 = vst [vmem:[#allocation7] sm:$0xff] %v1231
    %1248 = vst [vmem:[#allocation7 + $0x8] sm:$0xff] %v1232
    %1249 = vst [vmem:[#allocation7 + $0x10] sm:$0xff] %v1233
    %1250 = vst [vmem:[#allocation7 + $0x18] sm:$0xff] %v1234
    %1251 = vst [vmem:[#allocation7 + $0x20] sm:$0xff] %v1235
    %1252 = vst [vmem:[#allocation7 + $0x28] sm:$0xff] %v1236
    %1253 = vst [vmem:[#allocation7 + $0x30] sm:$0xff] %v1237
    %1254 = vst [vmem:[#allocation7 + $0x38] sm:$0xff] %v1238
    %1255 = vst [vmem:[#allocation7 + $0x40] sm:$0xff] %v1239
    %1256 = vst [vmem:[#allocation7 + $0x48] sm:$0xff] %v1240
    %1257 = vst [vmem:[#allocation7 + $0x50] sm:$0xff] %v1241
    %1258 = vst [vmem:[#allocation7 + $0x58] sm:$0xff] %v1242
    %1259 = vst [vmem:[#allocation7 + $0x60] sm:$0xff] %v1243
    %1260 = vst [vmem:[#allocation7 + $0x68] sm:$0xff] %v1244
    %1261 = vst [vmem:[#allocation7 + $0x70] sm:$0xff] %v1245
    %1262 = vst [vmem:[#allocation7 + $0x78] sm:$0xff] %v1246
    // Predicated region
    $region34: #{tpu_custom_call.1} parent=1 // pred_check
      _
    $region35: #{tpu_custom_call.1} parent=1 // pred_check_branch
      %1264 = sbr.rel (0) target = $region37
    $region36: #{tpu_custom_call.1} parent=1 // pred_region
      %s1266 = ssub.s32 2048, 2048
      %1267 = vsyncadd [#allocation4], %s1266
      %s1268 = sshll.u32 [#allocation7], 4
      %s1269 = int_to_ptr.vmem [resolvable:$true] %s1268
      %1274 = dma.vmem_to_hbm [thread:$0]  %s1269, 2048, %s6, [#allocation4], 128, 128, 8
    $region37: #{tpu_custom_call.1} parent=1 // pred_fallthru
      _
    // Predicated region
    $region38: #{tpu_custom_call.1} parent=1 // pred_check
      _
    $region39: #{tpu_custom_call.1} parent=1 // pred_check_branch
      %1276 = sbr.rel (0) target = $region41
    $region40: #{tpu_custom_call.1} parent=1 // pred_region
      %1277 = dma.done [#allocation4], 2048
    $region41: #{tpu_custom_call.1} parent=1 // pred_fallthru
      _
    %1278 = vsyncpa [#allocation3], 1
    %1279 = vsyncpa [#allocation6], 1
    %1280 = vsyncpa [#allocation4], 1

</llo_original>
